<compile_context>
chip_gen: v5e
topology: v5e:2x2
jax: 0.10.0
libtpu: 0.0.40
codegen_flags: <defaults>
</compile_context>

<pallas_src>
import jax
import jax.numpy as jnp
from jax.experimental import pallas as pl
from jax.experimental.pallas import tpu as pltpu


def _round_up(x, m):
    return ((x + m - 1) // m) * m


# ---------------- Path A: weight fully resident, grid over M tiles only ----------------
def _mm_bn_relu_resident_kernel(p_ref, w_ref, scale_ref, bias_ref, o_ref):
    """relu((patches_tile @ W) * scale + bias) for one (tm, Cp) output tile.

    W / scale / bias use constant index_maps, so Pallas DMAs them into VMEM once and keeps
    them resident across all M tiles.  Single bf16 MXU contraction over the full padded
    K*K*Cin depth with f32 accumulation; BN + ReLU epilogue stays f32 on the VPU.
    """
    acc = jnp.dot(p_ref[...], w_ref[...], preferred_element_type=jnp.float32)
    o_ref[...] = jnp.maximum(acc * scale_ref[...] + bias_ref[...], 0.0).astype(o_ref.dtype)


# ---------------- Path B: tiled reduction fallback (very large K*K*Cin / Cout) ----------
def _mm_bn_relu_tiled_kernel(p_ref, w_ref, scale_ref, bias_ref, o_ref):
    """Accumulates directly into the resident f32 output block across the k axis."""
    k = pl.program_id(2)

    @pl.when(k == 0)
    def _init():
        o_ref[...] = jnp.zeros_like(o_ref)

    o_ref[...] += jnp.dot(p_ref[...], w_ref[...], preferred_element_type=jnp.float32)

    @pl.when(k == pl.num_programs(2) - 1)
    def _finalize():
        o_ref[...] = jnp.maximum(o_ref[...] * scale_ref[...] + bias_ref[...], 0.0)


def basic_conv2d(x_nchw, weight, gamma, beta, running_mean, running_var,
                 *, stride=1, padding=1, eps=1e-3):
    """Forward of BasicConv2d: conv(bias=False) -> BN(eval) -> ReLU.

    x_nchw:  (N, Cin, H, W)     float32
    weight:  (Cout, Cin, K, K)  float32
    returns: (N, Cout, Ho, Wo)  float32
    """
    N, Cin, H, W = x_nchw.shape
    Cout, Cin_w, K, K2 = weight.shape
    assert K == K2 and Cin_w == Cin
    Ho = (H + 2 * padding - K) // stride + 1
    Wo = (W + 2 * padding - K) // stride + 1

    # ---- layout + im2col (wrapper glue, plain JAX) ----
    x_nhwc = jnp.transpose(x_nchw, (0, 2, 3, 1)).astype(jnp.bfloat16)   # NHWC, bf16
    x_pad = jnp.pad(x_nhwc, ((0, 0), (padding, padding),
                             (padding, padding), (0, 0)))
    cols = []
    for kh in range(K):
        for kw in range(K):
            cols.append(x_pad[:, kh:kh + Ho * stride:stride,
                              kw:kw + Wo * stride:stride, :])
    M = N * Ho * Wo
    Kc = K * K * Cin
    patches = jnp.concatenate(cols, axis=-1).reshape(M, Kc)    # (M, K*K*Cin), bf16

    # weight (Cout, Cin, K, K) -> (K, K, Cin, Cout) -> (K*K*Cin, Cout); same (kh, kw, cin)
    # row ordering as `patches`.
    w2d = jnp.transpose(weight, (2, 3, 1, 0)).reshape(Kc, Cout).astype(jnp.bfloat16)

    inv_std = gamma / jnp.sqrt(running_var + eps)
    scale2d = inv_std.astype(jnp.float32).reshape(1, Cout)
    bias2d = (beta - running_mean * inv_std).astype(jnp.float32).reshape(1, Cout)

    # ---- single 128-alignment of the lane dims (no second round-up to tile multiples) ----
    Kp = _round_up(Kc, 128)
    Cp = _round_up(Cout, 128)

    # ---- VMEM budget with headroom under the physical capacity ----
    try:
        vmem_cap = int(pltpu.get_tpu_info().vmem_capacity_bytes)
    except Exception:
        vmem_cap = 64 * 1024 * 1024              # conservative (v7x per-TC)
    vmem_budget = min((vmem_cap * 3) // 4, 96 * 1024 * 1024)   # ~48 MiB v7x, ~96 MiB v5e/v6e
    tile_budget = vmem_budget - (4 * 1024 * 1024)              # slack for compiler scratch

    # ---- M tile candidates (largest first, bounded padding waste, bf16-friendly) ----
    if M <= 512:
        cand0 = _round_up(M, 16)                 # single M tile at small sizes
        tm_cands = [t for t in (cand0, 256, 128) if t <= cand0]
    else:
        tm_cands = [t for t in (512, 256, 128) if (_round_up(M, t) - M) * 8 <= M]
        if not tm_cands:
            tm_cands = [128]

    resident_bytes = Kp * Cp * 2 + 2 * Cp * 4    # bf16 weight + f32 scale/bias (held in VMEM)

    def _fits_resident(tm_):
        per_tile = 2 * tm_ * Kp * 2 + 2 * tm_ * Cp * 4   # dbl-buffered bf16 patches + f32 out
        return resident_bytes + per_tile <= tile_budget

    tm_resident = next((t for t in tm_cands if _fits_resident(t)), None)

    if tm_resident is not None:
        # ------------------------------ Path A ------------------------------
        tm = tm_resident
        Mp = _round_up(M, tm)
        patches_p = jnp.pad(patches, ((0, Mp - M), (0, Kp - Kc)))
        w_p = jnp.pad(w2d, ((0, Kp - Kc), (0, Cp - Cout)))
        scale_p = jnp.pad(scale2d, ((0, 0), (0, Cp - Cout)))
        bias_p = jnp.pad(bias2d, ((0, 0), (0, Cp - Cout)))

        cost = pl.CostEstimate(
            flops=2 * Mp * Kp * Cp,
            transcendentals=0,
            bytes_accessed=Mp * Kp * 2 + Kp * Cp * 2 + Mp * Cp * 4 + 2 * Cp * 4)

        out2d = pl.pallas_call(
            _mm_bn_relu_resident_kernel,
            out_shape=jax.ShapeDtypeStruct((Mp, Cp), jnp.float32),
            grid_spec=pltpu.PrefetchScalarGridSpec(
                num_scalar_prefetch=0,
                grid=(Mp // tm,),
                in_specs=[
                    pl.BlockSpec((tm, Kp), lambda i: (i, 0)),   # patches: streamed over M
                    pl.BlockSpec((Kp, Cp), lambda i: (0, 0)),   # weight: DMA'd once, resident
                    pl.BlockSpec((1, Cp), lambda i: (0, 0)),    # BN scale: resident
                    pl.BlockSpec((1, Cp), lambda i: (0, 0)),    # BN bias: resident
                ],
                out_specs=pl.BlockSpec((tm, Cp), lambda i: (i, 0)),
            ),
            compiler_params=pltpu.CompilerParams(
                dimension_semantics=("parallel",),
                vmem_limit_bytes=vmem_budget),
            cost_estimate=cost,
        )(patches_p, w_p, scale_p, bias_p)
    else:
        # ------------------------------ Path B ------------------------------
        tn = 256 if Cp % 256 == 0 else 128                  # exact divisor of Cp
        tk_list = [t for t in (1024, 512, 256, 128) if Kp % t == 0]   # exact divisors of Kp

        def _fits_tiled(tm_, tk_):
            return (2 * tm_ * tk_ * 2 + 2 * tk_ * tn * 2
                    + 2 * tm_ * tn * 4 + 4 * tn * 4) <= tile_budget

        tm, tk = tm_cands[-1], 128
        done = False
        for tm_c in tm_cands:
            for tk_c in tk_list:
                if _fits_tiled(tm_c, tk_c):
                    tm, tk = tm_c, tk_c
                    done = True
                    break
            if done:
                break

        Mp = _round_up(M, tm)
        patches_p = jnp.pad(patches, ((0, Mp - M), (0, Kp - Kc)))
        w_p = jnp.pad(w2d, ((0, Kp - Kc), (0, Cp - Cout)))
        scale_p = jnp.pad(scale2d, ((0, 0), (0, Cp - Cout)))
        bias_p = jnp.pad(bias2d, ((0, 0), (0, Cp - Cout)))

        cost = pl.CostEstimate(
            flops=2 * Mp * Kp * Cp,
            transcendentals=0,
            bytes_accessed=(Mp * Kp * 2 * (Cp // tn)
                            + Kp * Cp * 2 * (Mp // tm)
                            + Mp * Cp * 4))

        out2d = pl.pallas_call(
            _mm_bn_relu_tiled_kernel,
            out_shape=jax.ShapeDtypeStruct((Mp, Cp), jnp.float32),
            grid_spec=pltpu.PrefetchScalarGridSpec(
                num_scalar_prefetch=0,
                grid=(Mp // tm, Cp // tn, Kp // tk),
                in_specs=[
                    pl.BlockSpec((tm, tk), lambda i, j, k: (i, k)),   # patches
                    pl.BlockSpec((tk, tn), lambda i, j, k: (k, j)),   # weight
                    pl.BlockSpec((1, tn), lambda i, j, k: (0, j)),    # BN scale
                    pl.BlockSpec((1, tn), lambda i, j, k: (0, j)),    # BN bias
                ],
                out_specs=pl.BlockSpec((tm, tn), lambda i, j, k: (i, j)),
            ),
            compiler_params=pltpu.CompilerParams(
                dimension_semantics=("parallel", "parallel", "arbitrary"),
                vmem_limit_bytes=vmem_budget),
            cost_estimate=cost,
        )(patches_p, w_p, scale_p, bias_p)

    out = out2d[:M, :Cout].reshape(N, Ho, Wo, Cout)
    return jnp.transpose(out, (0, 3, 1, 2)).astype(x_nchw.dtype)   # back to NCHW


if __name__ == "__main__":
    # Small shapes consistent with the module: N=2, Cin=4, H=W=16, Cout=8, K=3, pad=1.
    key = jax.random.PRNGKey(0)
    k_x, k_w, k_g, k_b, k_m, k_v = jax.random.split(key, 6)

    N, Cin, H, W = 2, 4, 16, 16
    Cout, K = 8, 3

    x = jax.random.normal(k_x, (N, Cin, H, W), dtype=jnp.float32)
    weight = jax.random.normal(k_w, (Cout, Cin, K, K), dtype=jnp.float32) * 0.1
    gamma = jax.random.uniform(k_g, (Cout,), minval=0.5, maxval=1.5)
    beta = jax.random.normal(k_b, (Cout,)) * 0.1
    running_mean = jax.random.normal(k_m, (Cout,)) * 0.1
    running_var = jax.random.uniform(k_v, (Cout,), minval=0.5, maxval=1.5)

    out = basic_conv2d(x, weight, gamma, beta, running_mean, running_var,
                       stride=1, padding=1, eps=1e-3)
    jax.block_until_ready(out)

    # Reference: same bf16-rounded operands (the kernel feeds the MXU bf16), f32 conv
    # + eval-mode BN + ReLU.
    x_r = x.astype(jnp.bfloat16).astype(jnp.float32)
    w_r = weight.astype(jnp.bfloat16).astype(jnp.float32)
    ref = jax.lax.conv_general_dilated(
        x_r, w_r, window_strides=(1, 1), padding=((1, 1), (1, 1)),
        dimension_numbers=("NCHW", "OIHW", "NCHW"),
        precision=jax.lax.Precision.HIGHEST)
    s = (gamma / jnp.sqrt(running_var + 1e-3)).reshape(1, Cout, 1, 1)
    b = (beta - running_mean * gamma / jnp.sqrt(running_var + 1e-3)).reshape(1, Cout, 1, 1)
    ref = jnp.maximum(ref * s + b, 0.0)

    assert out.shape == (N, Cout, H, W)
    assert jnp.allclose(out, ref, atol=1e-3, rtol=1e-3), "mismatch vs reference"

    print("KERNEL_OK")
</pallas_src>

<mosaic_0001>
module attributes {stable_mosaic.version = 11 : i64} {
  func.func @_mm_bn_relu_resident_kernel(%arg0: i32, %arg1: memref<512x128xbf16, #tpu.memory_space<vmem>>, %arg2: memref<128x128xbf16, #tpu.memory_space<vmem>>, %arg3: memref<1x128xf32, #tpu.memory_space<vmem>>, %arg4: memref<1x128xf32, #tpu.memory_space<vmem>>, %arg5: memref<512x128xf32, #tpu.memory_space<vmem>>) attributes {dimension_semantics = [#tpu.dimension_semantics<parallel>], iteration_bounds = array<i64: 1>, scalar_prefetch = 0 : i64, scratch_operands = 0 : i64, tpu.core_type = #tpu.core_type<tc>, window_params = [{transform_indices = @transform_0, window_bounds = array<i64: 512, 128>}, {pipeline_mode = #tpu.pipeline_mode<synchronous>, transform_indices = @transform_1, window_bounds = array<i64: 128, 128>}, {pipeline_mode = #tpu.pipeline_mode<synchronous>, transform_indices = @transform_2, window_bounds = array<i64: 1, 128>}, {pipeline_mode = #tpu.pipeline_mode<synchronous>, transform_indices = @transform_3, window_bounds = array<i64: 1, 128>}, {transform_indices = @transform_4, window_bounds = array<i64: 512, 128>}]} {
    %c0 = arith.constant 0 : index
    %c0_0 = arith.constant 0 : index
    %0 = vector.load %arg1[%c0, %c0_0] : memref<512x128xbf16, #tpu.memory_space<vmem>>, vector<512x128xbf16>
    %c0_1 = arith.constant 0 : index
    %c0_2 = arith.constant 0 : index
    %1 = vector.load %arg2[%c0_1, %c0_2] : memref<128x128xbf16, #tpu.memory_space<vmem>>, vector<128x128xbf16>
    %cst = arith.constant dense<0.000000e+00> : vector<512x128xf32>
    %2 = tpu.matmul %0, %1, %cst {dimension_numbers = #tpu.dot_dimension_numbers<[1], [0], [0], [1], [0, 0, 1, 1], [], []>} : vector<512x128xbf16>, vector<128x128xbf16>, vector<512x128xf32> -> vector<512x128xf32>
    %c0_3 = arith.constant 0 : index
    %c0_4 = arith.constant 0 : index
    %3 = vector.load %arg3[%c0_3, %c0_4] : memref<1x128xf32, #tpu.memory_space<vmem>>, vector<1x128xf32>
    %4 = vector.broadcast %3 : vector<1x128xf32> to vector<512x128xf32>
    %5 = arith.mulf %2, %4 : vector<512x128xf32>
    %c0_5 = arith.constant 0 : index
    %c0_6 = arith.constant 0 : index
    %6 = vector.load %arg4[%c0_5, %c0_6] : memref<1x128xf32, #tpu.memory_space<vmem>>, vector<1x128xf32>
    %7 = vector.broadcast %6 : vector<1x128xf32> to vector<512x128xf32>
    %8 = arith.addf %5, %7 : vector<512x128xf32>
    %cst_7 = arith.constant 0.000000e+00 : f32
    %9 = vector.broadcast %cst_7 : f32 to vector<512x128xf32>
    %10 = arith.maximumf %8, %9 : vector<512x128xf32>
    %c0_8 = arith.constant 0 : index
    %c0_9 = arith.constant 0 : index
    %11 = vector.load %arg5[%c0_8, %c0_9] : memref<512x128xf32, #tpu.memory_space<vmem>>, vector<512x128xf32>
    tpu.vector_store %arg5[%c0_8, %c0_9], %10 {strides = array<i32>} : memref<512x128xf32, #tpu.memory_space<vmem>>, vector<512x128xf32>,
    return
  }
  func.func @transform_0(%arg0: i32) -> (i32, i32) {
    %c0_i32 = arith.constant 0 : i32
    %c0_i32_0 = arith.constant 0 : i32
    return %arg0, %c0_i32 : i32, i32
  }
  func.func @transform_1(%arg0: i32) -> (i32, i32) {
    %c0_i32 = arith.constant 0 : i32
    %c0_i32_0 = arith.constant 0 : i32
    %c0_i32_1 = arith.constant 0 : i32
    return %c0_i32, %c0_i32_0 : i32, i32
  }
  func.func @transform_2(%arg0: i32) -> (i32, i32) {
    %c0_i32 = arith.constant 0 : i32
    %c0_i32_0 = arith.constant 0 : i32
    %c0_i32_1 = arith.constant 0 : i32
    return %c0_i32, %c0_i32_0 : i32, i32
  }
  func.func @transform_3(%arg0: i32) -> (i32, i32) {
    %c0_i32 = arith.constant 0 : i32
    %c0_i32_0 = arith.constant 0 : i32
    %c0_i32_1 = arith.constant 0 : i32
    return %c0_i32, %c0_i32_0 : i32, i32
  }
  func.func @transform_4(%arg0: i32) -> (i32, i32) {
    %c0_i32 = arith.constant 0 : i32
    %c0_i32_0 = arith.constant 0 : i32
    return %arg0, %c0_i32 : i32, i32
  }
}

</mosaic_0001>

<llo_original>
// kernel: tpu_custom_call.1
$region0: #{tpu_custom_call.1}
  #allocation0 [shape = 'u32[]', space=smem, size = 0x4, offset = 0x4, fixed_abs, tag = 'smem constant byte address 0x4 - core index']
  #allocation1 [shape = 'u32[72,128]{1,0:T(1,128)}', space=vmem, size = 0x9000, scoped, tag = 'internal scratch']
  %s0 = inlined_call_operand.hbm [shape: bf16[512,128], index: 0, kind: input, shape index: {}]
  %s1 = inlined_call_operand.hbm [shape: bf16[128,128], index: 1, kind: input, shape index: {}]
  %s2 = inlined_call_operand.vmem [shape: f32[1,128], index: 2, kind: input, shape index: {}]
  %s3 = inlined_call_operand.vmem [shape: f32[1,128], index: 3, kind: input, shape index: {}]
  %s4 = inlined_call_operand.hbm [shape: f32[512,128], index: 4, kind: output, shape index: {}]
  %s5 = sld [smem:[#allocation0]]
  $region34: #{tpu_custom_call.1} parent=0
    _
  %s7 = ssub.s32 1, %s5
  %s8 = scalar_select 0, %s7, %s5
  $region1: #{tpu_custom_call.1} parent=0
    #allocation2 [shape = 'u8[131072]{0}', space=vmem, size = 0x20000, scoped, tag = 'input window, operand 0, single buffered']
    #allocation3 [shape = 's32[1]{0}', space=sflag, size = 0x4, scoped, tag = 'scoped memory for tpu_custom_call.1']
    #allocation4 [shape = 's32[1]{0}', space=sflag, size = 0x4, scoped, tag = 'scoped memory for tpu_custom_call.1']
    #allocation5 [shape = 'u8[32768]{0}', space=vmem, size = 0x8000, scoped, tag = 'input window, operand 1, single buffered']
    #allocation6 [shape = 's32[1]{0}', space=sflag, size = 0x4, scoped, tag = 'scoped memory for tpu_custom_call.1']
    #allocation7 [shape = 'u8[262144]{0}', space=vmem, size = 0x40000, scoped, tag = 'output window, operand 0, single buffered']
    %9 = vsyncpa [#allocation3], 0
    %10 = vsyncpa [#allocation6], 0
    %11 = vsyncpa [#allocation4], 0
    // Predicated region
    $region2: #{tpu_custom_call.1} parent=1 // pred_check
      _
    $region3: #{tpu_custom_call.1} parent=1 // pred_check_branch
      %13 = sbr.rel (0) target = $region5
    $region4: #{tpu_custom_call.1} parent=1 // pred_region
      %15 = vsyncadd [#allocation3], 0
      %s16 = sshll.u32 %s0, 4
      %s17 = int_to_ptr.hbm [resolvable:$true] %s16
      %s18 = sshll.u32 [#allocation2], 4
      %s19 = int_to_ptr.vmem [resolvable:$true] %s18
      %24 = dma.hbm_to_vmem [thread:$0]  %s17, 4096, %s19, [#allocation3], 64, 64, 4
    $region5: #{tpu_custom_call.1} parent=1 // pred_fallthru
      _
    // Predicated region
    $region6: #{tpu_custom_call.1} parent=1 // pred_check
      _
    $region7: #{tpu_custom_call.1} parent=1 // pred_check_branch
      %26 = sbr.rel (0) target = $region9
    $region8: #{tpu_custom_call.1} parent=1 // pred_region
      %28 = vsyncadd [#allocation6], 0
      %s29 = sshll.u32 %s1, 4
      %s30 = int_to_ptr.hbm [resolvable:$true] %s29
      %s31 = sshll.u32 [#allocation5], 4
      %s32 = int_to_ptr.vmem [resolvable:$true] %s31
      %37 = dma.hbm_to_vmem [thread:$0]  %s30, 1024, %s32, [#allocation6], 64, 64, 4
    $region9: #{tpu_custom_call.1} parent=1 // pred_fallthru
      _
    // Predicated region
    $region10: #{tpu_custom_call.1} parent=1 // pred_check
      _
    $region11: #{tpu_custom_call.1} parent=1 // pred_check_branch
      %39 = sbr.rel (0) target = $region13
    $region12: #{tpu_custom_call.1} parent=1 // pred_region
      _
    $region13: #{tpu_custom_call.1} parent=1 // pred_fallthru
      _
    // Predicated region
    $region14: #{tpu_custom_call.1} parent=1 // pred_check
      _
    $region15: #{tpu_custom_call.1} parent=1 // pred_check_branch
      %41 = sbr.rel (0) target = $region17
    $region16: #{tpu_custom_call.1} parent=1 // pred_region
      _
    $region17: #{tpu_custom_call.1} parent=1 // pred_fallthru
      _
    // Predicated region
    $region18: #{tpu_custom_call.1} parent=1 // pred_check
      _
    $region19: #{tpu_custom_call.1} parent=1 // pred_check_branch
      %43 = sbr.rel (0) target = $region21
    $region20: #{tpu_custom_call.1} parent=1 // pred_region
      %45 = dma.done [#allocation3], 4096
    $region21: #{tpu_custom_call.1} parent=1 // pred_fallthru
      _
    // Predicated region
    $region22: #{tpu_custom_call.1} parent=1 // pred_check
      _
    $region23: #{tpu_custom_call.1} parent=1 // pred_check_branch
      %47 = sbr.rel (0) target = $region25
    $region24: #{tpu_custom_call.1} parent=1 // pred_region
      %49 = dma.done [#allocation6], 1024
    $region25: #{tpu_custom_call.1} parent=1 // pred_fallthru
      _
    %v50 = vld [vmem:[#allocation2] sm:$0xf]
    %v51 = vld [vmem:[#allocation2 + $0x4] sm:$0xf]
    %v52 = vld [vmem:[#allocation2 + $0x8] sm:$0xf]
    %v53 = vld [vmem:[#allocation2 + $0xc] sm:$0xf]
    %v54 = vld [vmem:[#allocation2 + $0x10] sm:$0xf]
    %v55 = vld [vmem:[#allocation2 + $0x14] sm:$0xf]
    %v56 = vld [vmem:[#allocation2 + $0x18] sm:$0xf]
    %v57 = vld [vmem:[#allocation2 + $0x1c] sm:$0xf]
    %v58 = vld [vmem:[#allocation2 + $0x20] sm:$0xf]
    %v59 = vld [vmem:[#allocation2 + $0x24] sm:$0xf]
    %v60 = vld [vmem:[#allocation2 + $0x28] sm:$0xf]
    %v61 = vld [vmem:[#allocation2 + $0x2c] sm:$0xf]
    %v62 = vld [vmem:[#allocation2 + $0x30] sm:$0xf]
    %v63 = vld [vmem:[#allocation2 + $0x34] sm:$0xf]
    %v64 = vld [vmem:[#allocation2 + $0x38] sm:$0xf]
    %v65 = vld [vmem:[#allocation2 + $0x3c] sm:$0xf]
    %v66 = vld [vmem:[#allocation2 + $0x40] sm:$0xf]
    %v67 = vld [vmem:[#allocation2 + $0x44] sm:$0xf]
    %v68 = vld [vmem:[#allocation2 + $0x48] sm:$0xf]
    %v69 = vld [vmem:[#allocation2 + $0x4c] sm:$0xf]
    %v70 = vld [vmem:[#allocation2 + $0x50] sm:$0xf]
    %v71 = vld [vmem:[#allocation2 + $0x54] sm:$0xf]
    %v72 = vld [vmem:[#allocation2 + $0x58] sm:$0xf]
    %v73 = vld [vmem:[#allocation2 + $0x5c] sm:$0xf]
    %v74 = vld [vmem:[#allocation2 + $0x60] sm:$0xf]
    %v75 = vld [vmem:[#allocation2 + $0x64] sm:$0xf]
    %v76 = vld [vmem:[#allocation2 + $0x68] sm:$0xf]
    %v77 = vld [vmem:[#allocation2 + $0x6c] sm:$0xf]
    %v78 = vld [vmem:[#allocation2 + $0x70] sm:$0xf]
    %v79 = vld [vmem:[#allocation2 + $0x74] sm:$0xf]
    %v80 = vld [vmem:[#allocation2 + $0x78] sm:$0xf]
    %v81 = vld [vmem:[#allocation2 + $0x7c] sm:$0xf]
    %v82 = vld [vmem:[#allocation2 + $0x80] sm:$0xf]
    %v83 = vld [vmem:[#allocation2 + $0x84] sm:$0xf]
    %v84 = vld [vmem:[#allocation2 + $0x88] sm:$0xf]
    %v85 = vld [vmem:[#allocation2 + $0x8c] sm:$0xf]
    %v86 = vld [vmem:[#allocation2 + $0x90] sm:$0xf]
    %v87 = vld [vmem:[#allocation2 + $0x94] sm:$0xf]
    %v88 = vld [vmem:[#allocation2 + $0x98] sm:$0xf]
    %v89 = vld [vmem:[#allocation2 + $0x9c] sm:$0xf]
    %v90 = vld [vmem:[#allocation2 + $0xa0] sm:$0xf]
    %v91 = vld [vmem:[#allocation2 + $0xa4] sm:$0xf]
    %v92 = vld [vmem:[#allocation2 + $0xa8] sm:$0xf]
    %v93 = vld [vmem:[#allocation2 + $0xac] sm:$0xf]
    %v94 = vld [vmem:[#allocation2 + $0xb0] sm:$0xf]
    %v95 = vld [vmem:[#allocation2 + $0xb4] sm:$0xf]
    %v96 = vld [vmem:[#allocation2 + $0xb8] sm:$0xf]
    %v97 = vld [vmem:[#allocation2 + $0xbc] sm:$0xf]
    %v98 = vld [vmem:[#allocation2 + $0xc0] sm:$0xf]
    %v99 = vld [vmem:[#allocation2 + $0xc4] sm:$0xf]
    %v100 = vld [vmem:[#allocation2 + $0xc8] sm:$0xf]
    %v101 = vld [vmem:[#allocation2 + $0xcc] sm:$0xf]
    %v102 = vld [vmem:[#allocation2 + $0xd0] sm:$0xf]
    %v103 = vld [vmem:[#allocation2 + $0xd4] sm:$0xf]
    %v104 = vld [vmem:[#allocation2 + $0xd8] sm:$0xf]
    %v105 = vld [vmem:[#allocation2 + $0xdc] sm:$0xf]
    %v106 = vld [vmem:[#allocation2 + $0xe0] sm:$0xf]
    %v107 = vld [vmem:[#allocation2 + $0xe4] sm:$0xf]
    %v108 = vld [vmem:[#allocation2 + $0xe8] sm:$0xf]
    %v109 = vld [vmem:[#allocation2 + $0xec] sm:$0xf]
    %v110 = vld [vmem:[#allocation2 + $0xf0] sm:$0xf]
    %v111 = vld [vmem:[#allocation2 + $0xf4] sm:$0xf]
    %v112 = vld [vmem:[#allocation2 + $0xf8] sm:$0xf]
    %v113 = vld [vmem:[#allocation2 + $0xfc] sm:$0xf]
    %v114 = vld [vmem:[#allocation5] sm:$0xf]
    %v115 = vld [vmem:[#allocation5 + $0x4] sm:$0xf]
    %v116 = vld [vmem:[#allocation5 + $0x8] sm:$0xf]
    %v117 = vld [vmem:[#allocation5 + $0xc] sm:$0xf]
    %v118 = vld [vmem:[#allocation5 + $0x10] sm:$0xf]
    %v119 = vld [vmem:[#allocation5 + $0x14] sm:$0xf]
    %v120 = vld [vmem:[#allocation5 + $0x18] sm:$0xf]
    %v121 = vld [vmem:[#allocation5 + $0x1c] sm:$0xf]
    %v122 = vld [vmem:[#allocation5 + $0x20] sm:$0xf]
    %v123 = vld [vmem:[#allocation5 + $0x24] sm:$0xf]
    %v124 = vld [vmem:[#allocation5 + $0x28] sm:$0xf]
    %v125 = vld [vmem:[#allocation5 + $0x2c] sm:$0xf]
    %v126 = vld [vmem:[#allocation5 + $0x30] sm:$0xf]
    %v127 = vld [vmem:[#allocation5 + $0x34] sm:$0xf]
    %v128 = vld [vmem:[#allocation5 + $0x38] sm:$0xf]
    %v129 = vld [vmem:[#allocation5 + $0x3c] sm:$0xf]
    %v194 = vunpack.c.l.b16 %v50
    %v195 = vunpack.c.l.b16 %v51
    %v196 = vunpack.c.l.b16 %v52
    %v197 = vunpack.c.l.b16 %v53
    %v198 = vunpack.c.l.b16 %v54
    %v199 = vunpack.c.l.b16 %v55
    %v200 = vunpack.c.l.b16 %v56
    %v201 = vunpack.c.l.b16 %v57
    %v202 = vunpack.c.l.b16 %v58
    %v203 = vunpack.c.l.b16 %v59
    %v204 = vunpack.c.l.b16 %v60
    %v205 = vunpack.c.l.b16 %v61
    %v206 = vunpack.c.l.b16 %v62
    %v207 = vunpack.c.l.b16 %v63
    %v208 = vunpack.c.l.b16 %v64
    %v209 = vunpack.c.l.b16 %v65
    %v210 = vunpack.c.l.b16 %v66
    %v211 = vunpack.c.l.b16 %v67
    %v212 = vunpack.c.l.b16 %v68
    %v213 = vunpack.c.l.b16 %v69
    %v214 = vunpack.c.l.b16 %v70
    %v215 = vunpack.c.l.b16 %v71
    %v216 = vunpack.c.l.b16 %v72
    %v217 = vunpack.c.l.b16 %v73
    %v218 = vunpack.c.l.b16 %v74
    %v219 = vunpack.c.l.b16 %v75
    %v220 = vunpack.c.l.b16 %v76
    %v221 = vunpack.c.l.b16 %v77
    %v222 = vunpack.c.l.b16 %v78
    %v223 = vunpack.c.l.b16 %v79
    %v224 = vunpack.c.l.b16 %v80
    %v225 = vunpack.c.l.b16 %v81
    %v226 = vunpack.c.l.b16 %v82
    %v227 = vunpack.c.l.b16 %v83
    %v228 = vunpack.c.l.b16 %v84
    %v229 = vunpack.c.l.b16 %v85
    %v230 = vunpack.c.l.b16 %v86
    %v231 = vunpack.c.l.b16 %v87
    %v232 = vunpack.c.l.b16 %v88
    %v233 = vunpack.c.l.b16 %v89
    %v234 = vunpack.c.l.b16 %v90
    %v235 = vunpack.c.l.b16 %v91
    %v236 = vunpack.c.l.b16 %v92
    %v237 = vunpack.c.l.b16 %v93
    %v238 = vunpack.c.l.b16 %v94
    %v239 = vunpack.c.l.b16 %v95
    %v240 = vunpack.c.l.b16 %v96
    %v241 = vunpack.c.l.b16 %v97
    %v242 = vunpack.c.l.b16 %v98
    %v243 = vunpack.c.l.b16 %v99
    %v244 = vunpack.c.l.b16 %v100
    %v245 = vunpack.c.l.b16 %v101
    %v246 = vunpack.c.l.b16 %v102
    %v247 = vunpack.c.l.b16 %v103
    %v248 = vunpack.c.l.b16 %v104
    %v249 = vunpack.c.l.b16 %v105
    %v250 = vunpack.c.l.b16 %v106
    %v251 = vunpack.c.l.b16 %v107
    %v252 = vunpack.c.l.b16 %v108
    %v253 = vunpack.c.l.b16 %v109
    %v254 = vunpack.c.l.b16 %v110
    %v255 = vunpack.c.l.b16 %v111
    %v256 = vunpack.c.l.b16 %v112
    %v257 = vunpack.c.l.b16 %v113
    %v258 = vpack.c.b16 %v195, %v194
    %v259 = vpack.c.b16 %v197, %v196
    %v260 = vpack.c.b16 %v199, %v198
    %v261 = vpack.c.b16 %v201, %v200
    %v262 = vpack.c.b16 %v203, %v202
    %v263 = vpack.c.b16 %v205, %v204
    %v264 = vpack.c.b16 %v207, %v206
    %v265 = vpack.c.b16 %v209, %v208
    %v266 = vpack.c.b16 %v211, %v210
    %v267 = vpack.c.b16 %v213, %v212
    %v268 = vpack.c.b16 %v215, %v214
    %v269 = vpack.c.b16 %v217, %v216
    %v270 = vpack.c.b16 %v219, %v218
    %v271 = vpack.c.b16 %v221, %v220
    %v272 = vpack.c.b16 %v223, %v222
    %v273 = vpack.c.b16 %v225, %v224
    %v274 = vpack.c.b16 %v227, %v226
    %v275 = vpack.c.b16 %v229, %v228
    %v276 = vpack.c.b16 %v231, %v230
    %v277 = vpack.c.b16 %v233, %v232
    %v278 = vpack.c.b16 %v235, %v234
    %v279 = vpack.c.b16 %v237, %v236
    %v280 = vpack.c.b16 %v239, %v238
    %v281 = vpack.c.b16 %v241, %v240
    %v282 = vpack.c.b16 %v243, %v242
    %v283 = vpack.c.b16 %v245, %v244
    %v284 = vpack.c.b16 %v247, %v246
    %v285 = vpack.c.b16 %v249, %v248
    %v286 = vpack.c.b16 %v251, %v250
    %v287 = vpack.c.b16 %v253, %v252
    %v288 = vpack.c.b16 %v255, %v254
    %v289 = vpack.c.b16 %v257, %v256
    %v338 = vunpack.c.l.b16 %v114
    %v339 = vunpack.c.l.b16 %v115
    %v340 = vunpack.c.l.b16 %v116
    %v341 = vunpack.c.l.b16 %v117
    %v342 = vunpack.c.l.b16 %v118
    %v343 = vunpack.c.l.b16 %v119
    %v344 = vunpack.c.l.b16 %v120
    %v345 = vunpack.c.l.b16 %v121
    %v346 = vunpack.c.l.b16 %v122
    %v347 = vunpack.c.l.b16 %v123
    %v348 = vunpack.c.l.b16 %v124
    %v349 = vunpack.c.l.b16 %v125
    %v350 = vunpack.c.l.b16 %v126
    %v351 = vunpack.c.l.b16 %v127
    %v352 = vunpack.c.l.b16 %v128
    %v353 = vunpack.c.l.b16 %v129
    %v354 = vpack.c.b16 %v339, %v338
    %v355 = vpack.c.b16 %v341, %v340
    %v356 = vpack.c.b16 %v343, %v342
    %v357 = vpack.c.b16 %v345, %v344
    %v358 = vpack.c.b16 %v347, %v346
    %v359 = vpack.c.b16 %v349, %v348
    %v360 = vpack.c.b16 %v351, %v350
    %v361 = vpack.c.b16 %v353, %v352
    %370 = vmatpush.bf16.msra.mxu0 %v361
    %371 = vmatpush.bf16.msra.mxu0 %v360
    %372 = vmatpush.bf16.msra.mxu0 %v359
    %373 = vmatpush.bf16.msra.mxu0 %v358
    %374 = vmatpush.bf16.msra.mxu0 %v357
    %375 = vmatpush.bf16.msra.mxu0 %v356
    %376 = vmatpush.bf16.msra.mxu0 %v355
    %377 = vmatpush.bf16.msra.mxu0 %v354
    %378 = vmatmul.bf16.gmra.mxu0 %v258
    %v379 = vpop.f32.mrf.mxu0
    %v380 = vadd.f32 0.0, %v379
    %v381 = vpop.f32.mrf.mxu0
    %v382 = vadd.f32 0.0, %v381
    %383 = vmatmul.bf16.gmra.mxu0 %v259
    %v384 = vpop.f32.mrf.mxu0
    %v385 = vadd.f32 0.0, %v384
    %v386 = vpop.f32.mrf.mxu0
    %v387 = vadd.f32 0.0, %v386
    %388 = vmatmul.bf16.gmra.mxu0 %v260
    %v389 = vpop.f32.mrf.mxu0
    %v390 = vadd.f32 0.0, %v389
    %v391 = vpop.f32.mrf.mxu0
    %v392 = vadd.f32 0.0, %v391
    %393 = vmatmul.bf16.gmra.mxu0 %v261
    %v394 = vpop.f32.mrf.mxu0
    %v395 = vadd.f32 0.0, %v394
    %v396 = vpop.f32.mrf.mxu0
    %v397 = vadd.f32 0.0, %v396
    %398 = vmatmul.bf16.gmra.mxu0 %v262
    %v399 = vpop.f32.mrf.mxu0
    %v400 = vadd.f32 0.0, %v399
    %v401 = vpop.f32.mrf.mxu0
    %v402 = vadd.f32 0.0, %v401
    %403 = vmatmul.bf16.gmra.mxu0 %v263
    %v404 = vpop.f32.mrf.mxu0
    %v405 = vadd.f32 0.0, %v404
    %v406 = vpop.f32.mrf.mxu0
    %v407 = vadd.f32 0.0, %v406
    %408 = vmatmul.bf16.gmra.mxu0 %v264
    %v409 = vpop.f32.mrf.mxu0
    %v410 = vadd.f32 0.0, %v409
    %v411 = vpop.f32.mrf.mxu0
    %v412 = vadd.f32 0.0, %v411
    %413 = vmatmul.bf16.gmra.mxu0 %v265
    %v414 = vpop.f32.mrf.mxu0
    %v415 = vadd.f32 0.0, %v414
    %v416 = vpop.f32.mrf.mxu0
    %v417 = vadd.f32 0.0, %v416
    %418 = vmatmul.bf16.gmra.mxu0 %v266
    %v419 = vpop.f32.mrf.mxu0
    %v420 = vadd.f32 0.0, %v419
    %v421 = vpop.f32.mrf.mxu0
    %v422 = vadd.f32 0.0, %v421
    %423 = vmatmul.bf16.gmra.mxu0 %v267
    %v424 = vpop.f32.mrf.mxu0
    %v425 = vadd.f32 0.0, %v424
    %v426 = vpop.f32.mrf.mxu0
    %v427 = vadd.f32 0.0, %v426
    %428 = vmatmul.bf16.gmra.mxu0 %v268
    %v429 = vpop.f32.mrf.mxu0
    %v430 = vadd.f32 0.0, %v429
    %v431 = vpop.f32.mrf.mxu0
    %v432 = vadd.f32 0.0, %v431
    %433 = vmatmul.bf16.gmra.mxu0 %v269
    %v434 = vpop.f32.mrf.mxu0
    %v435 = vadd.f32 0.0, %v434
    %v436 = vpop.f32.mrf.mxu0
    %v437 = vadd.f32 0.0, %v436
    %438 = vmatmul.bf16.gmra.mxu0 %v270
    %v439 = vpop.f32.mrf.mxu0
    %v440 = vadd.f32 0.0, %v439
    %v441 = vpop.f32.mrf.mxu0
    %v442 = vadd.f32 0.0, %v441
    %443 = vmatmul.bf16.gmra.mxu0 %v271
    %v444 = vpop.f32.mrf.mxu0
    %v445 = vadd.f32 0.0, %v444
    %v446 = vpop.f32.mrf.mxu0
    %v447 = vadd.f32 0.0, %v446
    %448 = vmatmul.bf16.gmra.mxu0 %v272
    %v449 = vpop.f32.mrf.mxu0
    %v450 = vadd.f32 0.0, %v449
    %v451 = vpop.f32.mrf.mxu0
    %v452 = vadd.f32 0.0, %v451
    %453 = vmatmul.bf16.gmra.mxu0 %v273
    %v454 = vpop.f32.mrf.mxu0
    %v455 = vadd.f32 0.0, %v454
    %v456 = vpop.f32.mrf.mxu0
    %v457 = vadd.f32 0.0, %v456
    %458 = vmatmul.bf16.gmra.mxu0 %v274
    %v459 = vpop.f32.mrf.mxu0
    %v460 = vadd.f32 0.0, %v459
    %v461 = vpop.f32.mrf.mxu0
    %v462 = vadd.f32 0.0, %v461
    %463 = vmatmul.bf16.gmra.mxu0 %v275
    %v464 = vpop.f32.mrf.mxu0
    %v465 = vadd.f32 0.0, %v464
    %v466 = vpop.f32.mrf.mxu0
    %v467 = vadd.f32 0.0, %v466
    %468 = vmatmul.bf16.gmra.mxu0 %v276
    %v469 = vpop.f32.mrf.mxu0
    %v470 = vadd.f32 0.0, %v469
    %v471 = vpop.f32.mrf.mxu0
    %v472 = vadd.f32 0.0, %v471
    %473 = vmatmul.bf16.gmra.mxu0 %v277
    %v474 = vpop.f32.mrf.mxu0
    %v475 = vadd.f32 0.0, %v474
    %v476 = vpop.f32.mrf.mxu0
    %v477 = vadd.f32 0.0, %v476
    %478 = vmatmul.bf16.gmra.mxu0 %v278
    %v479 = vpop.f32.mrf.mxu0
    %v480 = vadd.f32 0.0, %v479
    %v481 = vpop.f32.mrf.mxu0
    %v482 = vadd.f32 0.0, %v481
    %483 = vmatmul.bf16.gmra.mxu0 %v279
    %v484 = vpop.f32.mrf.mxu0
    %v485 = vadd.f32 0.0, %v484
    %v486 = vpop.f32.mrf.mxu0
    %v487 = vadd.f32 0.0, %v486
    %488 = vmatmul.bf16.gmra.mxu0 %v280
    %v489 = vpop.f32.mrf.mxu0
    %v490 = vadd.f32 0.0, %v489
    %v491 = vpop.f32.mrf.mxu0
    %v492 = vadd.f32 0.0, %v491
    %493 = vmatmul.bf16.gmra.mxu0 %v281
    %v494 = vpop.f32.mrf.mxu0
    %v495 = vadd.f32 0.0, %v494
    %v496 = vpop.f32.mrf.mxu0
    %v497 = vadd.f32 0.0, %v496
    %498 = vmatmul.bf16.gmra.mxu0 %v282
    %v499 = vpop.f32.mrf.mxu0
    %v500 = vadd.f32 0.0, %v499
    %v501 = vpop.f32.mrf.mxu0
    %v502 = vadd.f32 0.0, %v501
    %503 = vmatmul.bf16.gmra.mxu0 %v283
    %v504 = vpop.f32.mrf.mxu0
    %v505 = vadd.f32 0.0, %v504
    %v506 = vpop.f32.mrf.mxu0
    %v507 = vadd.f32 0.0, %v506
    %508 = vmatmul.bf16.gmra.mxu0 %v284
    %v509 = vpop.f32.mrf.mxu0
    %v510 = vadd.f32 0.0, %v509
    %v511 = vpop.f32.mrf.mxu0
    %v512 = vadd.f32 0.0, %v511
    %513 = vmatmul.bf16.gmra.mxu0 %v285
    %v514 = vpop.f32.mrf.mxu0
    %v515 = vadd.f32 0.0, %v514
    %v516 = vpop.f32.mrf.mxu0
    %v517 = vadd.f32 0.0, %v516
    %518 = vmatmul.bf16.gmra.mxu0 %v286
    %v519 = vpop.f32.mrf.mxu0
    %v520 = vadd.f32 0.0, %v519
    %v521 = vpop.f32.mrf.mxu0
    %v522 = vadd.f32 0.0, %v521
    %523 = vmatmul.bf16.gmra.mxu0 %v287
    %v524 = vpop.f32.mrf.mxu0
    %v525 = vadd.f32 0.0, %v524
    %v526 = vpop.f32.mrf.mxu0
    %v527 = vadd.f32 0.0, %v526
    %528 = vmatmul.bf16.gmra.mxu0 %v288
    %v529 = vpop.f32.mrf.mxu0
    %v530 = vadd.f32 0.0, %v529
    %v531 = vpop.f32.mrf.mxu0
    %v532 = vadd.f32 0.0, %v531
    %533 = vmatmul.bf16.gmra.mxu0 %v289
    %v534 = vpop.f32.mrf.mxu0
    %v535 = vadd.f32 0.0, %v534
    %v536 = vpop.f32.mrf.mxu0
    %v537 = vadd.f32 0.0, %v536
    %538 = vdwg.mxu0
    %v539 = vld [vmem:[%s2] sm:$0x1]
    %v541 = vperm.slane %v539, 0
    %v543 = vmul.f32 %v380, %v541
    %v544 = vmul.f32 %v382, %v541
    %v545 = vmul.f32 %v385, %v541
    %v546 = vmul.f32 %v387, %v541
    %v547 = vmul.f32 %v390, %v541
    %v548 = vmul.f32 %v392, %v541
    %v549 = vmul.f32 %v395, %v541
    %v550 = vmul.f32 %v397, %v541
    %v551 = vmul.f32 %v400, %v541
    %v552 = vmul.f32 %v402, %v541
    %v553 = vmul.f32 %v405, %v541
    %v554 = vmul.f32 %v407, %v541
    %v555 = vmul.f32 %v410, %v541
    %v556 = vmul.f32 %v412, %v541
    %v557 = vmul.f32 %v415, %v541
    %v558 = vmul.f32 %v417, %v541
    %v559 = vmul.f32 %v420, %v541
    %v560 = vmul.f32 %v422, %v541
    %v561 = vmul.f32 %v425, %v541
    %v562 = vmul.f32 %v427, %v541
    %v563 = vmul.f32 %v430, %v541
    %v564 = vmul.f32 %v432, %v541
    %v565 = vmul.f32 %v435, %v541
    %v566 = vmul.f32 %v437, %v541
    %v567 = vmul.f32 %v440, %v541
    %v568 = vmul.f32 %v442, %v541
    %v569 = vmul.f32 %v445, %v541
    %v570 = vmul.f32 %v447, %v541
    %v571 = vmul.f32 %v450, %v541
    %v572 = vmul.f32 %v452, %v541
    %v573 = vmul.f32 %v455, %v541
    %v574 = vmul.f32 %v457, %v541
    %v575 = vmul.f32 %v460, %v541
    %v576 = vmul.f32 %v462, %v541
    %v577 = vmul.f32 %v465, %v541
    %v578 = vmul.f32 %v467, %v541
    %v579 = vmul.f32 %v470, %v541
    %v580 = vmul.f32 %v472, %v541
    %v581 = vmul.f32 %v475, %v541
    %v582 = vmul.f32 %v477, %v541
    %v583 = vmul.f32 %v480, %v541
    %v584 = vmul.f32 %v482, %v541
    %v585 = vmul.f32 %v485, %v541
    %v586 = vmul.f32 %v487, %v541
    %v587 = vmul.f32 %v490, %v541
    %v588 = vmul.f32 %v492, %v541
    %v589 = vmul.f32 %v495, %v541
    %v590 = vmul.f32 %v497, %v541
    %v591 = vmul.f32 %v500, %v541
    %v592 = vmul.f32 %v502, %v541
    %v593 = vmul.f32 %v505, %v541
    %v594 = vmul.f32 %v507, %v541
    %v595 = vmul.f32 %v510, %v541
    %v596 = vmul.f32 %v512, %v541
    %v597 = vmul.f32 %v515, %v541
    %v598 = vmul.f32 %v517, %v541
    %v599 = vmul.f32 %v520, %v541
    %v600 = vmul.f32 %v522, %v541
    %v601 = vmul.f32 %v525, %v541
    %v602 = vmul.f32 %v527, %v541
    %v603 = vmul.f32 %v530, %v541
    %v604 = vmul.f32 %v532, %v541
    %v605 = vmul.f32 %v535, %v541
    %v606 = vmul.f32 %v537, %v541
    %v607 = vld [vmem:[%s3] sm:$0x1]
    %v609 = vperm.slane %v607, 0
    %v611 = vadd.f32 %v543, %v609
    %v612 = vadd.f32 %v544, %v609
    %v613 = vadd.f32 %v545, %v609
    %v614 = vadd.f32 %v546, %v609
    %v615 = vadd.f32 %v547, %v609
    %v616 = vadd.f32 %v548, %v609
    %v617 = vadd.f32 %v549, %v609
    %v618 = vadd.f32 %v550, %v609
    %v619 = vadd.f32 %v551, %v609
    %v620 = vadd.f32 %v552, %v609
    %v621 = vadd.f32 %v553, %v609
    %v622 = vadd.f32 %v554, %v609
    %v623 = vadd.f32 %v555, %v609
    %v624 = vadd.f32 %v556, %v609
    %v625 = vadd.f32 %v557, %v609
    %v626 = vadd.f32 %v558, %v609
    %v627 = vadd.f32 %v559, %v609
    %v628 = vadd.f32 %v560, %v609
    %v629 = vadd.f32 %v561, %v609
    %v630 = vadd.f32 %v562, %v609
    %v631 = vadd.f32 %v563, %v609
    %v632 = vadd.f32 %v564, %v609
    %v633 = vadd.f32 %v565, %v609
    %v634 = vadd.f32 %v566, %v609
    %v635 = vadd.f32 %v567, %v609
    %v636 = vadd.f32 %v568, %v609
    %v637 = vadd.f32 %v569, %v609
    %v638 = vadd.f32 %v570, %v609
    %v639 = vadd.f32 %v571, %v609
    %v640 = vadd.f32 %v572, %v609
    %v641 = vadd.f32 %v573, %v609
    %v642 = vadd.f32 %v574, %v609
    %v643 = vadd.f32 %v575, %v609
    %v644 = vadd.f32 %v576, %v609
    %v645 = vadd.f32 %v577, %v609
    %v646 = vadd.f32 %v578, %v609
    %v647 = vadd.f32 %v579, %v609
    %v648 = vadd.f32 %v580, %v609
    %v649 = vadd.f32 %v581, %v609
    %v650 = vadd.f32 %v582, %v609
    %v651 = vadd.f32 %v583, %v609
    %v652 = vadd.f32 %v584, %v609
    %v653 = vadd.f32 %v585, %v609
    %v654 = vadd.f32 %v586, %v609
    %v655 = vadd.f32 %v587, %v609
    %v656 = vadd.f32 %v588, %v609
    %v657 = vadd.f32 %v589, %v609
    %v658 = vadd.f32 %v590, %v609
    %v659 = vadd.f32 %v591, %v609
    %v660 = vadd.f32 %v592, %v609
    %v661 = vadd.f32 %v593, %v609
    %v662 = vadd.f32 %v594, %v609
    %v663 = vadd.f32 %v595, %v609
    %v664 = vadd.f32 %v596, %v609
    %v665 = vadd.f32 %v597, %v609
    %v666 = vadd.f32 %v598, %v609
    %v667 = vadd.f32 %v599, %v609
    %v668 = vadd.f32 %v600, %v609
    %v669 = vadd.f32 %v601, %v609
    %v670 = vadd.f32 %v602, %v609
    %v671 = vadd.f32 %v603, %v609
    %v672 = vadd.f32 %v604, %v609
    %v673 = vadd.f32 %v605, %v609
    %v674 = vadd.f32 %v606, %v609
    %v675 = vmax.f32 %v611, 0.0
    %v676 = vmax.f32 %v612, 0.0
    %v677 = vmax.f32 %v613, 0.0
    %v678 = vmax.f32 %v614, 0.0
    %v679 = vmax.f32 %v615, 0.0
    %v680 = vmax.f32 %v616, 0.0
    %v681 = vmax.f32 %v617, 0.0
    %v682 = vmax.f32 %v618, 0.0
    %v683 = vmax.f32 %v619, 0.0
    %v684 = vmax.f32 %v620, 0.0
    %v685 = vmax.f32 %v621, 0.0
    %v686 = vmax.f32 %v622, 0.0
    %v687 = vmax.f32 %v623, 0.0
    %v688 = vmax.f32 %v624, 0.0
    %v689 = vmax.f32 %v625, 0.0
    %v690 = vmax.f32 %v626, 0.0
    %v691 = vmax.f32 %v627, 0.0
    %v692 = vmax.f32 %v628, 0.0
    %v693 = vmax.f32 %v629, 0.0
    %v694 = vmax.f32 %v630, 0.0
    %v695 = vmax.f32 %v631, 0.0
    %v696 = vmax.f32 %v632, 0.0
    %v697 = vmax.f32 %v633, 0.0
    %v698 = vmax.f32 %v634, 0.0
    %v699 = vmax.f32 %v635, 0.0
    %v700 = vmax.f32 %v636, 0.0
    %v701 = vmax.f32 %v637, 0.0
    %v702 = vmax.f32 %v638, 0.0
    %v703 = vmax.f32 %v639, 0.0
    %v704 = vmax.f32 %v640, 0.0
    %v705 = vmax.f32 %v641, 0.0
    %v706 = vmax.f32 %v642, 0.0
    %v707 = vmax.f32 %v643, 0.0
    %v708 = vmax.f32 %v644, 0.0
    %v709 = vmax.f32 %v645, 0.0
    %v710 = vmax.f32 %v646, 0.0
    %v711 = vmax.f32 %v647, 0.0
    %v712 = vmax.f32 %v648, 0.0
    %v713 = vmax.f32 %v649, 0.0
    %v714 = vmax.f32 %v650, 0.0
    %v715 = vmax.f32 %v651, 0.0
    %v716 = vmax.f32 %v652, 0.0
    %v717 = vmax.f32 %v653, 0.0
    %v718 = vmax.f32 %v654, 0.0
    %v719 = vmax.f32 %v655, 0.0
    %v720 = vmax.f32 %v656, 0.0
    %v721 = vmax.f32 %v657, 0.0
    %v722 = vmax.f32 %v658, 0.0
    %v723 = vmax.f32 %v659, 0.0
    %v724 = vmax.f32 %v660, 0.0
    %v725 = vmax.f32 %v661, 0.0
    %v726 = vmax.f32 %v662, 0.0
    %v727 = vmax.f32 %v663, 0.0
    %v728 = vmax.f32 %v664, 0.0
    %v729 = vmax.f32 %v665, 0.0
    %v730 = vmax.f32 %v666, 0.0
    %v731 = vmax.f32 %v667, 0.0
    %v732 = vmax.f32 %v668, 0.0
    %v733 = vmax.f32 %v669, 0.0
    %v734 = vmax.f32 %v670, 0.0
    %v735 = vmax.f32 %v671, 0.0
    %v736 = vmax.f32 %v672, 0.0
    %v737 = vmax.f32 %v673, 0.0
    %v738 = vmax.f32 %v674, 0.0
    %739 = vst [vmem:[#allocation7] sm:$0xff] %v675
    %740 = vst [vmem:[#allocation7 + $0x8] sm:$0xff] %v676
    %741 = vst [vmem:[#allocation7 + $0x10] sm:$0xff] %v677
    %742 = vst [vmem:[#allocation7 + $0x18] sm:$0xff] %v678
    %743 = vst [vmem:[#allocation7 + $0x20] sm:$0xff] %v679
    %744 = vst [vmem:[#allocation7 + $0x28] sm:$0xff] %v680
    %745 = vst [vmem:[#allocation7 + $0x30] sm:$0xff] %v681
    %746 = vst [vmem:[#allocation7 + $0x38] sm:$0xff] %v682
    %747 = vst [vmem:[#allocation7 + $0x40] sm:$0xff] %v683
    %748 = vst [vmem:[#allocation7 + $0x48] sm:$0xff] %v684
    %749 = vst [vmem:[#allocation7 + $0x50] sm:$0xff] %v685
    %750 = vst [vmem:[#allocation7 + $0x58] sm:$0xff] %v686
    %751 = vst [vmem:[#allocation7 + $0x60] sm:$0xff] %v687
    %752 = vst [vmem:[#allocation7 + $0x68] sm:$0xff] %v688
    %753 = vst [vmem:[#allocation7 + $0x70] sm:$0xff] %v689
    %754 = vst [vmem:[#allocation7 + $0x78] sm:$0xff] %v690
    %755 = vst [vmem:[#allocation7 + $0x80] sm:$0xff] %v691
    %756 = vst [vmem:[#allocation7 + $0x88] sm:$0xff] %v692
    %757 = vst [vmem:[#allocation7 + $0x90] sm:$0xff] %v693
    %758 = vst [vmem:[#allocation7 + $0x98] sm:$0xff] %v694
    %759 = vst [vmem:[#allocation7 + $0xa0] sm:$0xff] %v695
    %760 = vst [vmem:[#allocation7 + $0xa8] sm:$0xff] %v696
    %761 = vst [vmem:[#allocation7 + $0xb0] sm:$0xff] %v697
    %762 = vst [vmem:[#allocation7 + $0xb8] sm:$0xff] %v698
    %763 = vst [vmem:[#allocation7 + $0xc0] sm:$0xff] %v699
    %764 = vst [vmem:[#allocation7 + $0xc8] sm:$0xff] %v700
    %765 = vst [vmem:[#allocation7 + $0xd0] sm:$0xff] %v701
    %766 = vst [vmem:[#allocation7 + $0xd8] sm:$0xff] %v702
    %767 = vst [vmem:[#allocation7 + $0xe0] sm:$0xff] %v703
    %768 = vst [vmem:[#allocation7 + $0xe8] sm:$0xff] %v704
    %769 = vst [vmem:[#allocation7 + $0xf0] sm:$0xff] %v705
    %770 = vst [vmem:[#allocation7 + $0xf8] sm:$0xff] %v706
    %771 = vst [vmem:[#allocation7 + $0x100] sm:$0xff] %v707
    %772 = vst [vmem:[#allocation7 + $0x108] sm:$0xff] %v708
    %773 = vst [vmem:[#allocation7 + $0x110] sm:$0xff] %v709
    %774 = vst [vmem:[#allocation7 + $0x118] sm:$0xff] %v710
    %775 = vst [vmem:[#allocation7 + $0x120] sm:$0xff] %v711
    %776 = vst [vmem:[#allocation7 + $0x128] sm:$0xff] %v712
    %777 = vst [vmem:[#allocation7 + $0x130] sm:$0xff] %v713
    %778 = vst [vmem:[#allocation7 + $0x138] sm:$0xff] %v714
    %779 = vst [vmem:[#allocation7 + $0x140] sm:$0xff] %v715
    %780 = vst [vmem:[#allocation7 + $0x148] sm:$0xff] %v716
    %781 = vst [vmem:[#allocation7 + $0x150] sm:$0xff] %v717
    %782 = vst [vmem:[#allocation7 + $0x158] sm:$0xff] %v718
    %783 = vst [vmem:[#allocation7 + $0x160] sm:$0xff] %v719
    %784 = vst [vmem:[#allocation7 + $0x168] sm:$0xff] %v720
    %785 = vst [vmem:[#allocation7 + $0x170] sm:$0xff] %v721
    %786 = vst [vmem:[#allocation7 + $0x178] sm:$0xff] %v722
    %787 = vst [vmem:[#allocation7 + $0x180] sm:$0xff] %v723
    %788 = vst [vmem:[#allocation7 + $0x188] sm:$0xff] %v724
    %789 = vst [vmem:[#allocation7 + $0x190] sm:$0xff] %v725
    %790 = vst [vmem:[#allocation7 + $0x198] sm:$0xff] %v726
    %791 = vst [vmem:[#allocation7 + $0x1a0] sm:$0xff] %v727
    %792 = vst [vmem:[#allocation7 + $0x1a8] sm:$0xff] %v728
    %793 = vst [vmem:[#allocation7 + $0x1b0] sm:$0xff] %v729
    %794 = vst [vmem:[#allocation7 + $0x1b8] sm:$0xff] %v730
    %795 = vst [vmem:[#allocation7 + $0x1c0] sm:$0xff] %v731
    %796 = vst [vmem:[#allocation7 + $0x1c8] sm:$0xff] %v732
    %797 = vst [vmem:[#allocation7 + $0x1d0] sm:$0xff] %v733
    %798 = vst [vmem:[#allocation7 + $0x1d8] sm:$0xff] %v734
    %799 = vst [vmem:[#allocation7 + $0x1e0] sm:$0xff] %v735
    %800 = vst [vmem:[#allocation7 + $0x1e8] sm:$0xff] %v736
    %801 = vst [vmem:[#allocation7 + $0x1f0] sm:$0xff] %v737
    %802 = vst [vmem:[#allocation7 + $0x1f8] sm:$0xff] %v738
    // Predicated region
    $region26: #{tpu_custom_call.1} parent=1 // pred_check
      _
    $region27: #{tpu_custom_call.1} parent=1 // pred_check_branch
      %804 = sbr.rel (0) target = $region29
    $region28: #{tpu_custom_call.1} parent=1 // pred_region
      %806 = vsyncadd [#allocation4], 0
      %s807 = sshll.u32 [#allocation7], 4
      %s808 = int_to_ptr.vmem [resolvable:$true] %s807
      %s809 = sshll.u32 %s4, 4
      %s810 = int_to_ptr.hbm [resolvable:$true] %s809
      %815 = dma.vmem_to_hbm [thread:$0]  %s808, 8192, %s810, [#allocation4], 128, 128, 8
    $region29: #{tpu_custom_call.1} parent=1 // pred_fallthru
      _
    // Predicated region
    $region30: #{tpu_custom_call.1} parent=1 // pred_check
      _
    $region31: #{tpu_custom_call.1} parent=1 // pred_check_branch
      %817 = sbr.rel (0) target = $region33
    $region32: #{tpu_custom_call.1} parent=1 // pred_region
      %819 = dma.done [#allocation4], 8192
    $region33: #{tpu_custom_call.1} parent=1 // pred_fallthru
      _
    %820 = vsyncpa [#allocation3], 1
    %821 = vsyncpa [#allocation6], 1
    %822 = vsyncpa [#allocation4], 1

</llo_original>
